<compile_context>
chip_gen: v6e
topology: v6e:2x2x1
jax: 0.10.0
libtpu: 0.0.40
codegen_flags: <defaults>
</compile_context>

<pallas_src>
import functools

import jax
import jax.numpy as jnp
from jax.experimental import pallas as pl
from jax.experimental.pallas import tpu as pltpu


def _round_up(v, m):
    return (v + m - 1) // m * m


# --------------------------------------------------------------------------- #
# Kernel
# --------------------------------------------------------------------------- #
def _mlp_kernel(x_ref, w1_ref, b1_ref, w2_ref, b2_ref, o_ref):
    """One (tm, Dp) token tile; grid axis 1 streams hidden-dim blocks."""
    j = pl.program_id(1)

    x_bf16 = x_ref[...]                                   # (tm, Dp) bf16

    # First matmul on the MXU (bf16 x bf16 -> f32), bias in f32, then
    # tanh-approx GELU (tanh lowers to the EUP slot; the exact-erf f32
    # polynomial would saturate the VALU slot on v6e/v7x).
    h = jnp.dot(x_bf16, w1_ref[...], preferred_element_type=jnp.float32)
    h = jax.nn.gelu(h + b1_ref[...], approximate=True)

    # Partial contribution of this hidden block; accumulate directly into the
    # resident f32 output block (no separate accumulator scratch).
    part = jnp.dot(h.astype(jnp.bfloat16), w2_ref[...],
                   preferred_element_type=jnp.float32)

    @pl.when(j == 0)
    def _():
        o_ref[...] = part

    @pl.when(j > 0)
    def _():
        o_ref[...] += part

    @pl.when(j == pl.num_programs(1) - 1)
    def _():
        # Bias + residual in f32; Dp is a multiple of 128 -> lane-dense store.
        o_ref[...] += b2_ref[...] + x_bf16.astype(jnp.float32)


# --------------------------------------------------------------------------- #
# Tile / VMEM selection
# --------------------------------------------------------------------------- #
def _vmem_limit_bytes():
    """Per-core VMEM limit with headroom (≈56 MiB on v7x, ≈110 MiB on v5e/v6e)."""
    try:
        cap = int(pltpu.get_tpu_info().vmem_capacity_bytes)
    except Exception:                      # conservative default (v7x-sized)
        cap = 64 * 1024 * 1024
    return min(cap - 8 * 1024 * 1024, 110 * 1024 * 1024)


def _choose_tiles(M, Dp, Hp):
    """Return (tm, th, vmem_limit).

    Priority: (1) fully VMEM-resident weights (th == Hp) with the largest tm
    that fits; (2) otherwise (streamed weights) largest tm first -- weight
    traffic is (Mp/tm) * weight_bytes, so tm is the intensity lever -- then th.
    """
    vmem_limit = _vmem_limit_bytes()
    budget = vmem_limit - 4 * 1024 * 1024

    m_cap = _round_up(M, 8)
    tm_cands = [t for t in (1024, 512, 256, 128) if t <= m_cap] or [m_cap]
    th_cands = [t for t in (2048, 1024, 512, 256, 128) if t < Hp and Hp % t == 0]

    def usage(tm, th):
        return (2 * tm * Dp * 2          # x tile, bf16, double-buffered
                + 2 * tm * Dp * 4        # out tile, f32, double-buffered
                + 4 * Dp * th * 2        # W1 + W2 blocks, bf16, double-buffered
                + 4 * (th + Dp) * 4      # bias blocks
                + tm * th * 6            # hidden activation (f32 + bf16 copy)
                + tm * Dp * 4)           # headroom for f32 temporaries

    tm_sel, th_sel = tm_cands[-1], 128   # conservative fallback
    chosen = False
    for tm in tm_cands:                  # (1) resident weights, largest tm
        if usage(tm, Hp) <= budget:
            tm_sel, th_sel, chosen = tm, Hp, True
            break
    if not chosen:
        for tm in tm_cands:              # (2) streamed: tm first, then th
            for th in th_cands:
                if usage(tm, th) <= budget:
                    tm_sel, th_sel, chosen = tm, th, True
                    break
            if chosen:
                break

    # Megacore (v7x): keep >= 2 row tiles when there is enough work so the
    # "parallel" axis can be sharded across both TensorCores.
    while tm_sel > 128 and M >= 256 and (M + tm_sel - 1) // tm_sel < 2:
        tm_sel //= 2

    return tm_sel, th_sel, vmem_limit


# --------------------------------------------------------------------------- #
# Wrappers
# --------------------------------------------------------------------------- #
def pack_params(w1, b1, w2, b2):
    """Pad to lane-dense multiples of 128 and cast weights to bf16, once."""
    D, H = w1.shape
    Dp = _round_up(D, 128)
    Hp = _round_up(H, 128)
    w1p = jnp.pad(w1, ((0, Dp - D), (0, Hp - H))).astype(jnp.bfloat16)
    b1p = jnp.pad(b1.reshape(1, -1).astype(jnp.float32), ((0, 0), (0, Hp - H)))
    w2p = jnp.pad(w2, ((0, Hp - H), (0, Dp - D))).astype(jnp.bfloat16)
    b2p = jnp.pad(b2.reshape(1, -1).astype(jnp.float32), ((0, 0), (0, Dp - D)))
    return w1p, b1p, w2p, b2p


@functools.partial(jax.jit, static_argnames=("tm", "th", "vmem_limit"))
def _mlp_jit(x, w1p, b1p, w2p, b2p, *, tm, th, vmem_limit):
    B, S, D = x.shape
    Dp, Hp = w1p.shape
    M = B * S
    Mp = _round_up(M, tm)

    # Pre-cast x to bf16 (halves activation DMA; hoists the cast out of the
    # kernel's hidden-block loop).
    x2 = jnp.pad(x.reshape(M, D), ((0, Mp - M), (0, Dp - D))).astype(jnp.bfloat16)

    grid = (Mp // tm, Hp // th)            # reduction (hidden) axis last
    weight_reps = 1 if th == Hp else grid[0]  # resident weights: one DMA/call
    cost = pl.CostEstimate(
        flops=4 * Mp * Dp * Hp,                         # two matmuls
        transcendentals=Mp * Hp,                        # tanh per hidden elem
        bytes_accessed=(Mp * Dp * 2                     # x in (bf16)
                        + Mp * Dp * 4                   # out (f32)
                        + weight_reps * 2 * Dp * Hp * 2 # bf16 weights
                        + (Hp + Dp) * 4),               # biases
    )

    out = pl.pallas_call(
        _mlp_kernel,
        out_shape=jax.ShapeDtypeStruct((Mp, Dp), jnp.float32),
        grid_spec=pltpu.PrefetchScalarGridSpec(
            num_scalar_prefetch=0,
            grid=grid,
            in_specs=[
                pl.BlockSpec((tm, Dp), lambda i, j: (i, 0)),   # x tile (bf16)
                pl.BlockSpec((Dp, th), lambda i, j: (0, j)),   # W1 column block
                pl.BlockSpec((1, th), lambda i, j: (0, j)),    # b1 block
                pl.BlockSpec((th, Dp), lambda i, j: (j, 0)),   # W2 row block
                pl.BlockSpec((1, Dp), lambda i, j: (0, 0)),    # b2
            ],
            out_specs=pl.BlockSpec((tm, Dp), lambda i, j: (i, 0)),
        ),
        compiler_params=pltpu.CompilerParams(
            dimension_semantics=("parallel", "arbitrary"),
            vmem_limit_bytes=vmem_limit,
        ),
        cost_estimate=cost,
    )(x2, w1p, b1p, w2p, b2p)

    return out[:M, :D].reshape(B, S, D)


def mlp_forward(x, packed_params):
    """x: (batch, seq, d_model) f32 -> same shape, y = x + MLP(x) (eval mode)."""
    w1p = packed_params[0]
    B, S, _ = x.shape
    Dp, Hp = w1p.shape
    tm, th, vmem_limit = _choose_tiles(B * S, Dp, Hp)
    return _mlp_jit(x, *packed_params, tm=tm, th=th, vmem_limit=vmem_limit)


def init_params(key, d_model, expansion_factor=4):
    d_hidden = d_model * expansion_factor
    k1, k2, k3, k4 = jax.random.split(key, 4)
    # nn.Linear default init: U(-1/sqrt(fan_in), 1/sqrt(fan_in))
    lim1 = 1.0 / (d_model ** 0.5)
    lim2 = 1.0 / (d_hidden ** 0.5)
    w1 = jax.random.uniform(k1, (d_model, d_hidden), jnp.float32, -lim1, lim1)
    b1 = jax.random.uniform(k2, (1, d_hidden), jnp.float32, -lim1, lim1)
    w2 = jax.random.uniform(k3, (d_hidden, d_model), jnp.float32, -lim2, lim2)
    b2 = jax.random.uniform(k4, (1, d_model), jnp.float32, -lim2, lim2)
    return w1, b1, w2, b2


if __name__ == "__main__":
    key = jax.random.PRNGKey(0)
    kx, kp = jax.random.split(key)

    batch, seq, d_model = 2, 8, 32       # d_hidden = 128
    x = jax.random.normal(kx, (batch, seq, d_model), jnp.float32)
    w1, b1, w2, b2 = init_params(kp, d_model, expansion_factor=4)
    params = pack_params(w1, b1, w2, b2)

    out = mlp_forward(x, params)
    jax.block_until_ready(out)

    # Reference 1: same numerics recipe as the kernel (bf16 matmul operands,
    # f32 accumulation, tanh GELU, bf16 residual) -- validates tiling/padding.
    x2 = x.reshape(-1, d_model)
    xb = x2.astype(jnp.bfloat16)
    h = jnp.dot(xb, w1.astype(jnp.bfloat16),
                preferred_element_type=jnp.float32) + b1
    h = jax.nn.gelu(h, approximate=True)
    y = jnp.dot(h.astype(jnp.bfloat16), w2.astype(jnp.bfloat16),
                preferred_element_type=jnp.float32) + b2
    ref_matched = (xb.astype(jnp.float32) + y).reshape(batch, seq, d_model)
    assert jnp.allclose(out, ref_matched, atol=2e-3, rtol=2e-3), \
        "mismatch vs matched-numerics reference"

    # Reference 2: full-f32, exact-erf GELU (torch nn.GELU() eval semantics);
    # loose tolerance covers the bf16-matmul / tanh-GELU approximations.
    h32 = jax.nn.gelu(x2 @ w1 + b1, approximate=False)
    ref_f32 = (x2 + h32 @ w2 + b2).reshape(batch, seq, d_model)
    assert jnp.allclose(out, ref_f32, atol=5e-2, rtol=5e-2), \
        "mismatch vs fp32 exact-GELU reference"

    print("KERNEL_OK")
</pallas_src>

<mosaic_0001>
module attributes {stable_mosaic.version = 11 : i64} {
  func.func @_mlp_kernel(%arg0: i32, %arg1: i32, %arg2: memref<16x128xbf16, #tpu.memory_space<vmem>>, %arg3: memref<128x128xbf16, #tpu.memory_space<vmem>>, %arg4: memref<1x128xf32, #tpu.memory_space<vmem>>, %arg5: memref<128x128xbf16, #tpu.memory_space<vmem>>, %arg6: memref<1x128xf32, #tpu.memory_space<vmem>>, %arg7: memref<16x128xf32, #tpu.memory_space<vmem>>) attributes {dimension_semantics = [#tpu.dimension_semantics<parallel>, #tpu.dimension_semantics<arbitrary>], iteration_bounds = array<i64: 1, 1>, scalar_prefetch = 0 : i64, scratch_operands = 0 : i64, tpu.core_type = #tpu.core_type<tc>, window_params = [{transform_indices = @transform_0, window_bounds = array<i64: 16, 128>}, {transform_indices = @transform_1, window_bounds = array<i64: 128, 128>}, {transform_indices = @transform_2, window_bounds = array<i64: 1, 128>}, {transform_indices = @transform_3, window_bounds = array<i64: 128, 128>}, {pipeline_mode = #tpu.pipeline_mode<synchronous>, transform_indices = @transform_4, window_bounds = array<i64: 1, 128>}, {transform_indices = @transform_5, window_bounds = array<i64: 16, 128>}]} {
    %c0 = arith.constant 0 : index
    %c0_0 = arith.constant 0 : index
    %0 = vector.load %arg2[%c0, %c0_0] : memref<16x128xbf16, #tpu.memory_space<vmem>>, vector<16x128xbf16>
    %c0_1 = arith.constant 0 : index
    %c0_2 = arith.constant 0 : index
    %1 = vector.load %arg3[%c0_1, %c0_2] : memref<128x128xbf16, #tpu.memory_space<vmem>>, vector<128x128xbf16>
    %cst = arith.constant dense<0.000000e+00> : vector<16x128xf32>
    %2 = tpu.matmul %0, %1, %cst {dimension_numbers = #tpu.dot_dimension_numbers<[1], [0], [0], [1], [0, 0, 1, 1], [], []>} : vector<16x128xbf16>, vector<128x128xbf16>, vector<16x128xf32> -> vector<16x128xf32>
    %c0_3 = arith.constant 0 : index
    %c0_4 = arith.constant 0 : index
    %3 = vector.load %arg4[%c0_3, %c0_4] : memref<1x128xf32, #tpu.memory_space<vmem>>, vector<1x128xf32>
    %4 = vector.broadcast %3 : vector<1x128xf32> to vector<16x128xf32>
    %5 = arith.addf %2, %4 : vector<16x128xf32>
    %6 = arith.mulf %5, %5 : vector<16x128xf32>
    %7 = arith.mulf %5, %6 : vector<16x128xf32>
    %cst_5 = arith.constant 4.471500e-02 : f32
    %8 = vector.broadcast %cst_5 : f32 to vector<16x128xf32>
    %9 = arith.mulf %8, %7 : vector<16x128xf32>
    %10 = arith.addf %5, %9 : vector<16x128xf32>
    %cst_6 = arith.constant 0.797884583 : f32
    %11 = vector.broadcast %cst_6 : f32 to vector<16x128xf32>
    %12 = arith.mulf %11, %10 : vector<16x128xf32>
    %13 = math.tanh %12 : vector<16x128xf32>
    %cst_7 = arith.constant 1.000000e+00 : f32
    %14 = vector.broadcast %cst_7 : f32 to vector<16x128xf32>
    %15 = arith.addf %14, %13 : vector<16x128xf32>
    %cst_8 = arith.constant 5.000000e-01 : f32
    %16 = vector.broadcast %cst_8 : f32 to vector<16x128xf32>
    %17 = arith.mulf %16, %15 : vector<16x128xf32>
    %18 = arith.mulf %5, %17 : vector<16x128xf32>
    %19 = arith.truncf %18 : vector<16x128xf32> to vector<16x128xbf16>
    %c0_9 = arith.constant 0 : index
    %c0_10 = arith.constant 0 : index
    %20 = vector.load %arg5[%c0_9, %c0_10] : memref<128x128xbf16, #tpu.memory_space<vmem>>, vector<128x128xbf16>
    %cst_11 = arith.constant dense<0.000000e+00> : vector<16x128xf32>
    %21 = tpu.matmul %19, %20, %cst_11 {dimension_numbers = #tpu.dot_dimension_numbers<[1], [0], [0], [1], [0, 0, 1, 1], [], []>} : vector<16x128xbf16>, vector<128x128xbf16>, vector<16x128xf32> -> vector<16x128xf32>
    %c0_i32 = arith.constant 0 : i32
    %22 = arith.cmpi eq, %arg1, %c0_i32 : i32
    %23 = arith.extui %22 : i1 to i32
    %c0_i32_12 = arith.constant 0 : i32
    %24 = arith.cmpi ne, %23, %c0_i32_12 : i32
    scf.if %24 {
      %c0_17 = arith.constant 0 : index
      %c0_18 = arith.constant 0 : index
      %31 = vector.load %arg7[%c0_17, %c0_18] : memref<16x128xf32, #tpu.memory_space<vmem>>, vector<16x128xf32>
      tpu.vector_store %arg7[%c0_17, %c0_18], %21 {strides = array<i32>} : memref<16x128xf32, #tpu.memory_space<vmem>>, vector<16x128xf32>,
    } else {
    }
    %c0_i32_13 = arith.constant 0 : i32
    %25 = arith.cmpi sgt, %arg1, %c0_i32_13 : i32
    %26 = arith.extui %25 : i1 to i32
    %c0_i32_14 = arith.constant 0 : i32
    %27 = arith.cmpi ne, %26, %c0_i32_14 : i32
    scf.if %27 {
      %c0_17 = arith.constant 0 : index
      %c0_18 = arith.constant 0 : index
      %31 = vector.load %arg7[%c0_17, %c0_18] : memref<16x128xf32, #tpu.memory_space<vmem>>, vector<16x128xf32>
      %32 = arith.addf %31, %21 : vector<16x128xf32>
      %c0_19 = arith.constant 0 : index
      %c0_20 = arith.constant 0 : index
      %33 = vector.load %arg7[%c0_19, %c0_20] : memref<16x128xf32, #tpu.memory_space<vmem>>, vector<16x128xf32>
      tpu.vector_store %arg7[%c0_19, %c0_20], %32 {strides = array<i32>} : memref<16x128xf32, #tpu.memory_space<vmem>>, vector<16x128xf32>,
    } else {
    }
    %c0_i32_15 = arith.constant 0 : i32
    %28 = arith.cmpi eq, %arg1, %c0_i32_15 : i32
    %29 = arith.extui %28 : i1 to i32
    %c0_i32_16 = arith.constant 0 : i32
    %30 = arith.cmpi ne, %29, %c0_i32_16 : i32
    scf.if %30 {
      %c0_17 = arith.constant 0 : index
      %c0_18 = arith.constant 0 : index
      %31 = vector.load %arg7[%c0_17, %c0_18] : memref<16x128xf32, #tpu.memory_space<vmem>>, vector<16x128xf32>
      %c0_19 = arith.constant 0 : index
      %c0_20 = arith.constant 0 : index
      %32 = vector.load %arg6[%c0_19, %c0_20] : memref<1x128xf32, #tpu.memory_space<vmem>>, vector<1x128xf32>
      %33 = arith.extf %0 : vector<16x128xbf16> to vector<16x128xf32>
      %34 = vector.broadcast %32 : vector<1x128xf32> to vector<16x128xf32>
      %35 = arith.addf %34, %33 : vector<16x128xf32>
      %36 = arith.addf %31, %35 : vector<16x128xf32>
      %c0_21 = arith.constant 0 : index
      %c0_22 = arith.constant 0 : index
      %37 = vector.load %arg7[%c0_21, %c0_22] : memref<16x128xf32, #tpu.memory_space<vmem>>, vector<16x128xf32>
      tpu.vector_store %arg7[%c0_21, %c0_22], %36 {strides = array<i32>} : memref<16x128xf32, #tpu.memory_space<vmem>>, vector<16x128xf32>,
    } else {
    }
    return
  }
  func.func @transform_0(%arg0: i32, %arg1: i32) -> (i32, i32) {
    %c0_i32 = arith.constant 0 : i32
    %c0_i32_0 = arith.constant 0 : i32
    return %arg0, %c0_i32 : i32, i32
  }
  func.func @transform_1(%arg0: i32, %arg1: i32) -> (i32, i32) {
    %c0_i32 = arith.constant 0 : i32
    %c0_i32_0 = arith.constant 0 : i32
    return %c0_i32, %arg1 : i32, i32
  }
  func.func @transform_2(%arg0: i32, %arg1: i32) -> (i32, i32) {
    %c0_i32 = arith.constant 0 : i32
    %c0_i32_0 = arith.constant 0 : i32
    return %c0_i32, %arg1 : i32, i32
  }
  func.func @transform_3(%arg0: i32, %arg1: i32) -> (i32, i32) {
    %c0_i32 = arith.constant 0 : i32
    %c0_i32_0 = arith.constant 0 : i32
    return %arg1, %c0_i32 : i32, i32
  }
  func.func @transform_4(%arg0: i32, %arg1: i32) -> (i32, i32) {
    %c0_i32 = arith.constant 0 : i32
    %c0_i32_0 = arith.constant 0 : i32
    %c0_i32_1 = arith.constant 0 : i32
    return %c0_i32, %c0_i32_0 : i32, i32
  }
  func.func @transform_5(%arg0: i32, %arg1: i32) -> (i32, i32) {
    %c0_i32 = arith.constant 0 : i32
    %c0_i32_0 = arith.constant 0 : i32
    return %arg0, %c0_i32 : i32, i32
  }
}

</mosaic_0001>

<llo_original>
// kernel: _mlp_jit.1
$region0: #{_mlp_jit.1}
  #allocation0 [shape = 'u32[]', space=smem, size = 0x4, offset = 0x4, fixed_abs, tag = 'smem constant byte address 0x4 - core index']
  #allocation1 [shape = 'u32[144,128]{1,0:T(1,128)}', space=vmem, size = 0x12000, scoped, tag = 'internal scratch']
  %s0 = inlined_call_operand.vmem [shape: bf16[16,128], index: 0, kind: input, shape index: {}]
  %s1 = inlined_call_operand.hbm [shape: bf16[128,128], index: 1, kind: input, shape index: {}]
  %s2 = inlined_call_operand.vmem [shape: f32[1,128], index: 2, kind: input, shape index: {}]
  %s3 = inlined_call_operand.hbm [shape: bf16[128,128], index: 3, kind: input, shape index: {}]
  %s4 = inlined_call_operand.vmem [shape: f32[1,128], index: 4, kind: input, shape index: {}]
  %s5 = inlined_call_operand.vmem [shape: f32[16,128], index: 5, kind: output, shape index: {}]
  %s6 = sld [smem:[#allocation0]]
  $region50: #{_mlp_jit.1} parent=0
    _
  %s8 = ssub.s32 1, %s6
  %s9 = scalar_select 0, %s8, %s6
  $region1: #{_mlp_jit.1} parent=0
    #allocation2 [shape = 'u8[32768]{0}', space=vmem, size = 0x8000, scoped, tag = 'input window, operand 1, single buffered']
    #allocation3 [shape = 's32[1]{0}', space=sflag, size = 0x4, scoped, tag = 'scoped memory for _mlp_jit.1']
    #allocation4 [shape = 'u8[32768]{0}', space=vmem, size = 0x8000, scoped, tag = 'input window, operand 3, single buffered']
    #allocation5 [shape = 's32[1]{0}', space=sflag, size = 0x4, scoped, tag = 'scoped memory for _mlp_jit.1']
    %10 = vsyncpa [#allocation3], 0
    %11 = vsyncpa [#allocation5], 0
    // Predicated region
    $region2: #{_mlp_jit.1} parent=1 // pred_check
      _
    $region3: #{_mlp_jit.1} parent=1 // pred_check_branch
      %13 = sbr.rel (0) target = $region5
    $region4: #{_mlp_jit.1} parent=1 // pred_region
      _
    $region5: #{_mlp_jit.1} parent=1 // pred_fallthru
      _
    // Predicated region
    $region6: #{_mlp_jit.1} parent=1 // pred_check
      _
    $region7: #{_mlp_jit.1} parent=1 // pred_check_branch
      %15 = sbr.rel (0) target = $region9
    $region8: #{_mlp_jit.1} parent=1 // pred_region
      %s17 = ssub.s32 1024, 1024
      %18 = vsyncadd [#allocation3], %s17
      %s19 = sshll.u32 [#allocation2], 4
      %s20 = int_to_ptr.vmem [resolvable:$true] %s19
      %25 = dma.hbm_to_vmem [thread:$0]  %s1, 1024, %s20, [#allocation3], 64, 64, 4
    $region9: #{_mlp_jit.1} parent=1 // pred_fallthru
      _
    // Predicated region
    $region10: #{_mlp_jit.1} parent=1 // pred_check
      _
    $region11: #{_mlp_jit.1} parent=1 // pred_check_branch
      %27 = sbr.rel (0) target = $region13
    $region12: #{_mlp_jit.1} parent=1 // pred_region
      _
    $region13: #{_mlp_jit.1} parent=1 // pred_fallthru
      _
    // Predicated region
    $region14: #{_mlp_jit.1} parent=1 // pred_check
      _
    $region15: #{_mlp_jit.1} parent=1 // pred_check_branch
      %29 = sbr.rel (0) target = $region17
    $region16: #{_mlp_jit.1} parent=1 // pred_region
      %s31 = ssub.s32 1024, 1024
      %32 = vsyncadd [#allocation5], %s31
      %s33 = sshll.u32 [#allocation4], 4
      %s34 = int_to_ptr.vmem [resolvable:$true] %s33
      %39 = dma.hbm_to_vmem [thread:$0]  %s3, 1024, %s34, [#allocation5], 64, 64, 4
    $region17: #{_mlp_jit.1} parent=1 // pred_fallthru
      _
    // Predicated region
    $region18: #{_mlp_jit.1} parent=1 // pred_check
      _
    $region19: #{_mlp_jit.1} parent=1 // pred_check_branch
      %41 = sbr.rel (0) target = $region21
    $region20: #{_mlp_jit.1} parent=1 // pred_region
      _
    $region21: #{_mlp_jit.1} parent=1 // pred_fallthru
      _
    // Predicated region
    $region22: #{_mlp_jit.1} parent=1 // pred_check
      _
    $region23: #{_mlp_jit.1} parent=1 // pred_check_branch
      %43 = sbr.rel (0) target = $region25
    $region24: #{_mlp_jit.1} parent=1 // pred_region
      %44 = dma.done [#allocation3], 1024
    $region25: #{_mlp_jit.1} parent=1 // pred_fallthru
      _
    // Predicated region
    $region26: #{_mlp_jit.1} parent=1 // pred_check
      _
    $region27: #{_mlp_jit.1} parent=1 // pred_check_branch
      %46 = sbr.rel (0) target = $region29
    $region28: #{_mlp_jit.1} parent=1 // pred_region
      %47 = dma.done [#allocation5], 1024
    $region29: #{_mlp_jit.1} parent=1 // pred_fallthru
      _
    %v49 = vld [vmem:[%s0] sm:$0xf]
    %v50 = vld [vmem:[%s0 + $0x4] sm:$0xf]
    %v51 = vld [vmem:[#allocation2] sm:$0xf]
    %v52 = vld [vmem:[#allocation2 + $0x4] sm:$0xf]
    %v53 = vld [vmem:[#allocation2 + $0x8] sm:$0xf]
    %v54 = vld [vmem:[#allocation2 + $0xc] sm:$0xf]
    %v55 = vld [vmem:[#allocation2 + $0x10] sm:$0xf]
    %v56 = vld [vmem:[#allocation2 + $0x14] sm:$0xf]
    %v57 = vld [vmem:[#allocation2 + $0x18] sm:$0xf]
    %v58 = vld [vmem:[#allocation2 + $0x1c] sm:$0xf]
    %v59 = vld [vmem:[#allocation2 + $0x20] sm:$0xf]
    %v60 = vld [vmem:[#allocation2 + $0x24] sm:$0xf]
    %v61 = vld [vmem:[#allocation2 + $0x28] sm:$0xf]
    %v62 = vld [vmem:[#allocation2 + $0x2c] sm:$0xf]
    %v63 = vld [vmem:[#allocation2 + $0x30] sm:$0xf]
    %v64 = vld [vmem:[#allocation2 + $0x34] sm:$0xf]
    %v65 = vld [vmem:[#allocation2 + $0x38] sm:$0xf]
    %v66 = vld [vmem:[#allocation2 + $0x3c] sm:$0xf]
    %v67 = vld [vmem:[%s2] sm:$0x1]
    %v69 = vlaneseq
    %v70 = vshrl.u32 %v69, 7
    %v71 = vsub.s32 0, %v70
    %v72 = vrot.slane %v67, %v71
    %v76 = vunpack.c.l.b16 %v49
    %v77 = vunpack.c.l.b16 %v50
    %v78 = vpack.c.b16 %v77, %v76
    %v96 = vunpack.c.l.b16 %v51
    %v97 = vunpack.c.l.b16 %v52
    %v98 = vunpack.c.l.b16 %v53
    %v99 = vunpack.c.l.b16 %v54
    %v100 = vunpack.c.l.b16 %v55
    %v101 = vunpack.c.l.b16 %v56
    %v102 = vunpack.c.l.b16 %v57
    %v103 = vunpack.c.l.b16 %v58
    %v104 = vunpack.c.l.b16 %v59
    %v105 = vunpack.c.l.b16 %v60
    %v106 = vunpack.c.l.b16 %v61
    %v107 = vunpack.c.l.b16 %v62
    %v108 = vunpack.c.l.b16 %v63
    %v109 = vunpack.c.l.b16 %v64
    %v110 = vunpack.c.l.b16 %v65
    %v111 = vunpack.c.l.b16 %v66
    %v112 = vpack.c.b16 %v97, %v96
    %v113 = vpack.c.b16 %v99, %v98
    %v114 = vpack.c.b16 %v101, %v100
    %v115 = vpack.c.b16 %v103, %v102
    %v116 = vpack.c.b16 %v105, %v104
    %v117 = vpack.c.b16 %v107, %v106
    %v118 = vpack.c.b16 %v109, %v108
    %v119 = vpack.c.b16 %v111, %v110
    %128 = vmatprep.subr.bf16.mxu0 0
    %129 = vmatpush1.bf16.msra.mxu0 %v119
    %130 = vmatprep.subr.bf16.mxu0 0
    %131 = vmatpush1.bf16.msra.mxu0 %v118
    %132 = vmatprep.subr.bf16.mxu0 0
    %133 = vmatpush1.bf16.msra.mxu0 %v117
    %134 = vmatprep.subr.bf16.mxu0 0
    %135 = vmatpush1.bf16.msra.mxu0 %v116
    %136 = vmatprep.subr.bf16.mxu0 0
    %137 = vmatpush1.bf16.msra.mxu0 %v115
    %138 = vmatprep.subr.bf16.mxu0 0
    %139 = vmatpush1.bf16.msra.mxu0 %v114
    %140 = vmatprep.subr.bf16.mxu0 0
    %141 = vmatpush1.bf16.msra.mxu0 %v113
    %142 = vmatprep.subr.bf16.mxu0 0
    %143 = vmatpush1.bf16.msra.mxu0 %v112
    %144 = vmatprep.subr.bf16.mxu0 0
    %145 = vmatpush2.bf16.msra.mxu0 0
    %146 = vmatprep.subr.bf16.mxu0 0
    %147 = vmatpush2.bf16.msra.mxu0 0
    %148 = vmatprep.subr.bf16.mxu0 0
    %149 = vmatpush2.bf16.msra.mxu0 0
    %150 = vmatprep.subr.bf16.mxu0 0
    %151 = vmatpush2.bf16.msra.mxu0 0
    %152 = vmatprep.subr.bf16.mxu0 0
    %153 = vmatpush2.bf16.msra.mxu0 0
    %154 = vmatprep.subr.bf16.mxu0 0
    %155 = vmatpush2.bf16.msra.mxu0 0
    %156 = vmatprep.subr.bf16.mxu0 0
    %157 = vmatpush2.bf16.msra.mxu0 0
    %158 = vmatprep.subr.bf16.mxu0 0
    %159 = vmatpush2.bf16.msra.mxu0 0
    %160 = vmatprep.mubr.bf16.mxu0 0
    %161 = vmatmul.mubr.bf16.gmra.mxu0 %v78
    %v162 = vpop.f32.mrf.mxu0
    %v163 = vadd.f32 %v72, %v162
    %v164 = vpop.f32.mrf.mxu0
    %v165 = vpop.f32.mrf.mxu0
    %v166 = vadd.f32 %v72, %v165
    %v167 = vpop.f32.mrf.mxu0
    %168 = vdwg.mxu0
    %v169 = vmul.f32 %v163, %v163
    %v170 = vmul.f32 %v166, %v166
    %v171 = vmul.f32 %v163, %v169
    %v172 = vmul.f32 %v166, %v170
    %v173 = vmul.f32 %v171, 0.044715
    %v174 = vmul.f32 %v172, 0.044715
    %v175 = vadd.f32 %v163, %v173
    %v176 = vadd.f32 %v166, %v174
    %v177 = vmul.f32 %v175, 0.7978846
    %v178 = vmul.f32 %v176, 0.7978846
    %v179 = vtanh.pop %v177
    %v180 = vtanh.pop %v178
    %v181 = vadd.f32 %v179, 1.0
    %v182 = vadd.f32 %v180, 1.0
    %v183 = vmul.f32 %v181, 0.5
    %v184 = vmul.f32 %v182, 0.5
    %v185 = vmul.f32 %v163, %v183
    %v186 = vmul.f32 %v166, %v184
    %v187 = vpack.c.bf16 %v186, %v185
    %v188 = vld [vmem:[#allocation4] sm:$0xf]
    %v189 = vld [vmem:[#allocation4 + $0x4] sm:$0xf]
    %v190 = vld [vmem:[#allocation4 + $0x8] sm:$0xf]
    %v191 = vld [vmem:[#allocation4 + $0xc] sm:$0xf]
    %v192 = vld [vmem:[#allocation4 + $0x10] sm:$0xf]
    %v193 = vld [vmem:[#allocation4 + $0x14] sm:$0xf]
    %v194 = vld [vmem:[#allocation4 + $0x18] sm:$0xf]
    %v195 = vld [vmem:[#allocation4 + $0x1c] sm:$0xf]
    %v196 = vld [vmem:[#allocation4 + $0x20] sm:$0xf]
    %v197 = vld [vmem:[#allocation4 + $0x24] sm:$0xf]
    %v198 = vld [vmem:[#allocation4 + $0x28] sm:$0xf]
    %v199 = vld [vmem:[#allocation4 + $0x2c] sm:$0xf]
    %v200 = vld [vmem:[#allocation4 + $0x30] sm:$0xf]
    %v201 = vld [vmem:[#allocation4 + $0x34] sm:$0xf]
    %v202 = vld [vmem:[#allocation4 + $0x38] sm:$0xf]
    %v203 = vld [vmem:[#allocation4 + $0x3c] sm:$0xf]
    %v220 = vunpack.c.l.b16 %v188
    %v221 = vunpack.c.l.b16 %v189
    %v222 = vunpack.c.l.b16 %v190
    %v223 = vunpack.c.l.b16 %v191
    %v224 = vunpack.c.l.b16 %v192
    %v225 = vunpack.c.l.b16 %v193
    %v226 = vunpack.c.l.b16 %v194
    %v227 = vunpack.c.l.b16 %v195
    %v228 = vunpack.c.l.b16 %v196
    %v229 = vunpack.c.l.b16 %v197
    %v230 = vunpack.c.l.b16 %v198
    %v231 = vunpack.c.l.b16 %v199
    %v232 = vunpack.c.l.b16 %v200
    %v233 = vunpack.c.l.b16 %v201
    %v234 = vunpack.c.l.b16 %v202
    %v235 = vunpack.c.l.b16 %v203
    %v236 = vpack.c.b16 %v221, %v220
    %v237 = vpack.c.b16 %v223, %v222
    %v238 = vpack.c.b16 %v225, %v224
    %v239 = vpack.c.b16 %v227, %v226
    %v240 = vpack.c.b16 %v229, %v228
    %v241 = vpack.c.b16 %v231, %v230
    %v242 = vpack.c.b16 %v233, %v232
    %v243 = vpack.c.b16 %v235, %v234
    %252 = vmatprep.subr.bf16.mxu0 0
    %253 = vmatpush1.bf16.msra.mxu0 %v243
    %254 = vmatprep.subr.bf16.mxu0 0
    %255 = vmatpush1.bf16.msra.mxu0 %v242
    %256 = vmatprep.subr.bf16.mxu0 0
    %257 = vmatpush1.bf16.msra.mxu0 %v241
    %258 = vmatprep.subr.bf16.mxu0 0
    %259 = vmatpush1.bf16.msra.mxu0 %v240
    %260 = vmatprep.subr.bf16.mxu0 0
    %261 = vmatpush1.bf16.msra.mxu0 %v239
    %262 = vmatprep.subr.bf16.mxu0 0
    %263 = vmatpush1.bf16.msra.mxu0 %v238
    %264 = vmatprep.subr.bf16.mxu0 0
    %265 = vmatpush1.bf16.msra.mxu0 %v237
    %266 = vmatprep.subr.bf16.mxu0 0
    %267 = vmatpush1.bf16.msra.mxu0 %v236
    %268 = vmatprep.subr.bf16.mxu0 0
    %269 = vmatpush2.bf16.msra.mxu0 0
    %270 = vmatprep.subr.bf16.mxu0 0
    %271 = vmatpush2.bf16.msra.mxu0 0
    %272 = vmatprep.subr.bf16.mxu0 0
    %273 = vmatpush2.bf16.msra.mxu0 0
    %274 = vmatprep.subr.bf16.mxu0 0
    %275 = vmatpush2.bf16.msra.mxu0 0
    %276 = vmatprep.subr.bf16.mxu0 0
    %277 = vmatpush2.bf16.msra.mxu0 0
    %278 = vmatprep.subr.bf16.mxu0 0
    %279 = vmatpush2.bf16.msra.mxu0 0
    %280 = vmatprep.subr.bf16.mxu0 0
    %281 = vmatpush2.bf16.msra.mxu0 0
    %282 = vmatprep.subr.bf16.mxu0 0
    %283 = vmatpush2.bf16.msra.mxu0 0
    %284 = vmatprep.mubr.bf16.mxu0 0
    %285 = vmatmul.mubr.bf16.gmra.mxu0 %v187
    %v286 = vpop.f32.mrf.mxu0
    %v287 = vadd.f32 0.0, %v286
    %v288 = vpop.f32.mrf.mxu0
    %v289 = vpop.f32.mrf.mxu0
    %v290 = vadd.f32 0.0, %v289
    %v291 = vpop.f32.mrf.mxu0
    %292 = vdwg.mxu0
    %p293 = scmp.eq.s32.totalorder 0, 0
    // Predicated region
    $region30: #{_mlp_jit.1} parent=1 // pred_check
      %p294 = pneg %p293
    $region31: #{_mlp_jit.1} parent=1 // pred_check_branch
      %296 = sbr.rel (%p294) target = $region33
    $region32: #{_mlp_jit.1} parent=1 // pred_region
      %297 = vst [vmem:[%s5] sm:$0xff] %v287
      %298 = vst [vmem:[%s5 + $0x8] sm:$0xff] %v290
    $region33: #{_mlp_jit.1} parent=1 // pred_fallthru
      _
    %p299 = scmp.gt.s32.totalorder 0, 0
    // Predicated region
    $region34: #{_mlp_jit.1} parent=1 // pred_check
      %p300 = pneg %p299
    $region35: #{_mlp_jit.1} parent=1 // pred_check_branch
      %302 = sbr.rel (%p300) target = $region37
    $region36: #{_mlp_jit.1} parent=1 // pred_region
      %v303 = vld [vmem:[%s5] sm:$0xff]
      %v304 = vld [vmem:[%s5 + $0x8] sm:$0xff]
      %v305 = vadd.f32 %v303, %v287
      %v306 = vadd.f32 %v304, %v290
      %307 = vst [vmem:[%s5] sm:$0xff] %v305
      %308 = vst [vmem:[%s5 + $0x8] sm:$0xff] %v306
    $region37: #{_mlp_jit.1} parent=1 // pred_fallthru
      _
    // Predicated region
    $region38: #{_mlp_jit.1} parent=1 // pred_check
      %p309 = pneg %p293
    $region39: #{_mlp_jit.1} parent=1 // pred_check_branch
      %311 = sbr.rel (%p309) target = $region41
    $region40: #{_mlp_jit.1} parent=1 // pred_region
      %v312 = vld [vmem:[%s5] sm:$0xff]
      %v313 = vld [vmem:[%s5 + $0x8] sm:$0xff]
      %v314 = vld [vmem:[%s4] sm:$0x1]
      %v315 = vunpack.c.l.bf16 %v49
      %v316 = vunpack.c.l.bf16 %v50
      %v318 = vlaneseq
      %v319 = vshrl.u32 %v318, 7
      %v320 = vsub.s32 0, %v319
      %v321 = vrot.slane %v314, %v320
      %v323 = vadd.f32 %v321, %v315
      %v324 = vadd.f32 %v321, %v316
      %v325 = vadd.f32 %v312, %v323
      %v326 = vadd.f32 %v313, %v324
      %327 = vst [vmem:[%s5] sm:$0xff] %v325
      %328 = vst [vmem:[%s5 + $0x8] sm:$0xff] %v326
    $region41: #{_mlp_jit.1} parent=1 // pred_fallthru
      _
    // Predicated region
    $region42: #{_mlp_jit.1} parent=1 // pred_check
      _
    $region43: #{_mlp_jit.1} parent=1 // pred_check_branch
      %330 = sbr.rel (0) target = $region45
    $region44: #{_mlp_jit.1} parent=1 // pred_region
      _
    $region45: #{_mlp_jit.1} parent=1 // pred_fallthru
      _
    // Predicated region
    $region46: #{_mlp_jit.1} parent=1 // pred_check
      _
    $region47: #{_mlp_jit.1} parent=1 // pred_check_branch
      %332 = sbr.rel (0) target = $region49
    $region48: #{_mlp_jit.1} parent=1 // pred_region
      _
    $region49: #{_mlp_jit.1} parent=1 // pred_fallthru
      _
    %333 = vsyncpa [#allocation3], 1
    %334 = vsyncpa [#allocation5], 1

</llo_original>
